<compile_context>
chip_gen: v7x
topology: tpu7x:2x2x1
jax: 0.10.0
libtpu: 0.0.40
codegen_flags: <defaults>
</compile_context>

<pallas_src>
import numpy as np
import jax
import jax.numpy as jnp
from jax.experimental import pallas as pl
from jax.experimental.pallas import tpu as pltpu

_LANES = 128


# --------------------------------------------------------------------------
# Kernels: identity "decode step" — move tiles through VMEM untouched.
# --------------------------------------------------------------------------
def _copy2_kernel(t_ref, s_ref, to_ref, so_ref):
    to_ref[...] = t_ref[...]
    so_ref[...] = s_ref[...]


def _copy1_kernel(x_ref, o_ref):
    o_ref[...] = x_ref[...]


# --------------------------------------------------------------------------
# Chip-generation-aware tiling budget.
# --------------------------------------------------------------------------
def _chip_tile_budget():
    """Returns (target block bytes, vmem_limit_bytes or None, split_for_two_cores)."""
    try:
        kind = jax.devices()[0].device_kind.lower()
    except Exception:  # pragma: no cover - defensive
        kind = ""
    if "7" in kind:                    # v7x: 64 MiB physical VMEM, 2 TCs, 3.2 TB/s
        return 8 << 20, 40 << 20, True
    if "v6" in kind:                   # v6e: 32 MiB scoped default, 128 MiB physical
        return 4 << 20, None, False
    return 2 << 20, None, False        # v5e / unknown: 16 MiB scoped default


def _tile_rows(rows, itemsize, block_bytes, split_for_two_cores):
    """Dtype-aware row tile: ~block_bytes per block, sublane-packing aligned."""
    packing = max(1, 4 // itemsize)    # f32: 1, bf16: 2, int8: 4
    sub = 8 * packing                  # legal sublane multiple for this dtype
    target = (block_bytes // (_LANES * itemsize)) // sub * sub
    target = max(sub, target)
    if rows > target:
        return target
    # Whole tensor fits in a single block.
    if split_for_two_cores and rows >= 2 * sub:
        half = -(-rows // 2)               # ceil(rows / 2)
        half = -(-half // sub) * sub       # round up to sublane multiple
        if half < rows:
            return half                    # >= 2 blocks so both v7x TCs work
    return rows                            # full extent: always layout-legal


# --------------------------------------------------------------------------
# Lane-dense (rows, 128) views with pad/slice restoration.
# --------------------------------------------------------------------------
def _to_lane_dense(x):
    """Return (lane-dense 2D view, restore_fn)."""
    orig_shape = x.shape
    total = x.size
    if total % _LANES == 0:
        rows = total // _LANES
        return x.reshape(rows, _LANES), (lambda y: y.reshape(orig_shape))

    # Pad the last dim up to a multiple of 128 so every store is an unmasked
    # `vst` (sub-128-lane outputs lower to masked vst.msk partial stores).
    last = orig_shape[-1]
    lead = int(np.prod(orig_shape[:-1])) if x.ndim > 1 else 1
    pad_last = (-last) % _LANES
    padded_last = last + pad_last
    xp = jnp.pad(x.reshape(lead, last), ((0, 0), (0, pad_last)))
    rows = lead * padded_last // _LANES
    x2d = xp.reshape(rows, _LANES)

    def restore(y):
        return y.reshape(lead, padded_last)[:, :last].reshape(orig_shape)

    return x2d, restore


# --------------------------------------------------------------------------
# Fused identity pass-through of (tgt, state) via one pallas_call.
# --------------------------------------------------------------------------
def _identity_kernel_call(tgt, state):
    t2d, t_restore = _to_lane_dense(tgt)
    s2d, s_restore = _to_lane_dense(state)
    block_bytes, vmem_limit, two_cores = _chip_tile_budget()
    compiler_params = pltpu.CompilerParams(
        dimension_semantics=("parallel",),
        vmem_limit_bytes=vmem_limit,
    )

    if t2d.shape == s2d.shape and t2d.dtype == s2d.dtype:
        # Fused path: both tensors share the grid; one launch, one pipeline.
        rows, lanes = t2d.shape
        tile = _tile_rows(rows, t2d.dtype.itemsize, block_bytes, two_cores)
        grid = (pl.cdiv(rows, tile),)
        nbytes = (t2d.size + s2d.size) * t2d.dtype.itemsize
        to2d, so2d = pl.pallas_call(
            _copy2_kernel,
            out_shape=(
                jax.ShapeDtypeStruct(t2d.shape, t2d.dtype),
                jax.ShapeDtypeStruct(s2d.shape, s2d.dtype),
            ),
            grid=grid,
            in_specs=[
                pl.BlockSpec((tile, lanes), lambda i: (i, 0)),
                pl.BlockSpec((tile, lanes), lambda i: (i, 0)),
            ],
            out_specs=(
                pl.BlockSpec((tile, lanes), lambda i: (i, 0)),
                pl.BlockSpec((tile, lanes), lambda i: (i, 0)),
            ),
            input_output_aliases={0: 0, 1: 1},
            compiler_params=compiler_params,
            cost_estimate=pl.CostEstimate(
                flops=0, transcendentals=0, bytes_accessed=2 * nbytes
            ),
        )(t2d, s2d)
        return t_restore(to2d), s_restore(so2d)

    # Fallback: shapes/dtypes differ — one aliased call per tensor.
    outs = []
    for x2d, restore in ((t2d, t_restore), (s2d, s_restore)):
        rows, lanes = x2d.shape
        tile = _tile_rows(rows, x2d.dtype.itemsize, block_bytes, two_cores)
        grid = (pl.cdiv(rows, tile),)
        nbytes = x2d.size * x2d.dtype.itemsize
        y2d = pl.pallas_call(
            _copy1_kernel,
            out_shape=jax.ShapeDtypeStruct(x2d.shape, x2d.dtype),
            grid=grid,
            in_specs=[pl.BlockSpec((tile, lanes), lambda i: (i, 0))],
            out_specs=pl.BlockSpec((tile, lanes), lambda i: (i, 0)),
            input_output_aliases={0: 0},
            compiler_params=compiler_params,
            cost_estimate=pl.CostEstimate(
                flops=0, transcendentals=0, bytes_accessed=2 * nbytes
            ),
        )(x2d)
        outs.append(restore(y2d))
    return tuple(outs)


# --------------------------------------------------------------------------
# Module wrapper.
# --------------------------------------------------------------------------
class DecoderPallas:
    """JAX/Pallas mirror of the abstract PyTorch Decoder base class.

    The reference module defines no parameters; init_state() and forward()
    are abstract. By default __call__ elides the identity kernel entirely
    (returning tgt/state is the fastest possible "copy"); pass
    run_identity_kernel=True to push the data through the real Pallas
    scaffold that a concrete subclass would build its fused compute into.
    """

    def __init__(self, run_identity_kernel: bool = False, **kwargs):
        self.run_identity_kernel = run_identity_kernel

    def init_state(self, enc_outputs: jnp.ndarray, *args):
        # Abstract in the reference module.
        raise NotImplementedError

    def forward(self, tgt: jnp.ndarray, state: jnp.ndarray):
        # Abstract in the reference module.
        raise NotImplementedError

    def __call__(self, tgt: jnp.ndarray, state: jnp.ndarray):
        assert tgt.ndim == 3 and state.ndim == 3, "expect (batch, seq, hidden)"
        if not self.run_identity_kernel:
            # Highest-value optimization: identity needs zero HBM traffic.
            return tgt, state
        # TODO(synk): real subclasses fuse tgt x state compute (attention /
        # matmuls) here; keep M/N grid axes "parallel", put the contraction
        # axis last as "arbitrary" with a VMEM f32 accumulator, and keep MXU
        # tiles 128/256-aligned per chip generation.
        return _identity_kernel_call(tgt, state)


if __name__ == "__main__":
    key = jax.random.PRNGKey(0)
    k_tgt, k_state = jax.random.split(key)

    batch, seq, hidden = 2, 8, 32
    tgt = jax.random.normal(k_tgt, (batch, seq, hidden), dtype=jnp.float32)
    state = jax.random.normal(k_state, (batch, seq, hidden), dtype=jnp.float32)

    # Snapshot inputs before the HBM-aliased kernel call so the numerical
    # check does not depend on the (donated) device buffers.
    tgt_ref = np.asarray(tgt)
    state_ref = np.asarray(state)

    # Default fast path: kernel elided, inputs returned untouched.
    fast = DecoderPallas()
    t_fast, s_fast = fast(tgt, state)
    assert t_fast is tgt and s_fast is state

    # Kernel path: one fused, aliased, pipelined pallas_call for both tensors.
    decoder = DecoderPallas(run_identity_kernel=True)
    tgt_out, state_out = decoder(tgt, state)
    jax.block_until_ready((tgt_out, state_out))

    assert tgt_out.shape == tgt.shape and state_out.shape == state.shape
    assert np.allclose(np.asarray(tgt_out), tgt_ref)
    assert np.allclose(np.asarray(state_out), state_ref)

    print("KERNEL_OK")
</pallas_src>

<mosaic_0001>
module attributes {stable_mosaic.version = 11 : i64} {
  func.func @_copy2_kernel(%arg0: i32, %arg1: memref<4x128xf32, #tpu.memory_space<vmem>>, %arg2: memref<4x128xf32, #tpu.memory_space<vmem>>, %arg3: memref<4x128xf32, #tpu.memory_space<vmem>>, %arg4: memref<4x128xf32, #tpu.memory_space<vmem>>) attributes {dimension_semantics = [#tpu.dimension_semantics<parallel>], iteration_bounds = array<i64: 1>, scalar_prefetch = 0 : i64, scratch_operands = 0 : i64, tpu.core_type = #tpu.core_type<tc>, window_params = [{transform_indices = @transform_0, window_bounds = array<i64: 4, 128>}, {transform_indices = @transform_1, window_bounds = array<i64: 4, 128>}, {transform_indices = @transform_2, window_bounds = array<i64: 4, 128>}, {transform_indices = @transform_3, window_bounds = array<i64: 4, 128>}]} {
    %c0 = arith.constant 0 : index
    %c0_0 = arith.constant 0 : index
    %0 = vector.load %arg1[%c0, %c0_0] : memref<4x128xf32, #tpu.memory_space<vmem>>, vector<4x128xf32>
    %c0_1 = arith.constant 0 : index
    %c0_2 = arith.constant 0 : index
    %1 = vector.load %arg3[%c0_1, %c0_2] : memref<4x128xf32, #tpu.memory_space<vmem>>, vector<4x128xf32>
    tpu.vector_store %arg3[%c0_1, %c0_2], %0 {strides = array<i32>} : memref<4x128xf32, #tpu.memory_space<vmem>>, vector<4x128xf32>,
    %c0_3 = arith.constant 0 : index
    %c0_4 = arith.constant 0 : index
    %2 = vector.load %arg2[%c0_3, %c0_4] : memref<4x128xf32, #tpu.memory_space<vmem>>, vector<4x128xf32>
    %c0_5 = arith.constant 0 : index
    %c0_6 = arith.constant 0 : index
    %3 = vector.load %arg4[%c0_5, %c0_6] : memref<4x128xf32, #tpu.memory_space<vmem>>, vector<4x128xf32>
    tpu.vector_store %arg4[%c0_5, %c0_6], %2 {strides = array<i32>} : memref<4x128xf32, #tpu.memory_space<vmem>>, vector<4x128xf32>,
    return
  }
  func.func @transform_0(%arg0: i32) -> (i32, i32) {
    %c0_i32 = arith.constant 0 : i32
    %c0_i32_0 = arith.constant 0 : i32
    return %arg0, %c0_i32 : i32, i32
  }
  func.func @transform_1(%arg0: i32) -> (i32, i32) {
    %c0_i32 = arith.constant 0 : i32
    %c0_i32_0 = arith.constant 0 : i32
    return %arg0, %c0_i32 : i32, i32
  }
  func.func @transform_2(%arg0: i32) -> (i32, i32) {
    %c0_i32 = arith.constant 0 : i32
    %c0_i32_0 = arith.constant 0 : i32
    return %arg0, %c0_i32 : i32, i32
  }
  func.func @transform_3(%arg0: i32) -> (i32, i32) {
    %c0_i32 = arith.constant 0 : i32
    %c0_i32_0 = arith.constant 0 : i32
    return %arg0, %c0_i32 : i32, i32
  }
}

</mosaic_0001>

<llo_original>
// kernel: tpu_custom_call.1
$region0: #{tpu_custom_call.1}
  #allocation0 [shape = 'u32[]', space=smem, size = 0x4, offset = 0x4, fixed_abs, tag = 'smem constant byte address 0x4 - core index']
  #allocation1 [shape = 'u32[144,128]{1,0:T(1,128)}', space=vmem, size = 0x12000, scoped, tag = 'internal scratch']
  %s0 = inlined_call_operand.hbm [shape: f32[4,128], index: 0, kind: input, shape index: {}, may-alias: {0,2}]
  %s1 = inlined_call_operand.hbm [shape: f32[4,128], index: 1, kind: input, shape index: {}, may-alias: {1,3}]
  %s2 = inlined_call_operand.hbm [shape: f32[4,128], index: 2, kind: output, shape index: {0}, may-alias: {0,2}]
  %s3 = inlined_call_operand.hbm [shape: f32[4,128], index: 3, kind: output, shape index: {1}, may-alias: {1,3}]
  %4 = xla_tuple %s2, %s3
  %s5 = sld [smem:[#allocation0]]
  $region34: #{tpu_custom_call.1} parent=0
    _
  %s7 = ssub.s32 1, %s5
  %s8 = scalar_select 0, %s7, %s5
  $region1: #{tpu_custom_call.1} parent=0
    #allocation2 [shape = 'u8[2048]{0}', space=vmem, size = 0x800, scoped, tag = 'input window, operand 0, single buffered']
    #allocation3 [shape = 's32[1]{0}', space=sflag, size = 0x4, scoped, tag = 'scoped memory for tpu_custom_call.1']
    #allocation4 [shape = 's32[1]{0}', space=sflag, size = 0x4, scoped, tag = 'scoped memory for tpu_custom_call.1']
    #allocation5 [shape = 'u8[2048]{0}', space=vmem, size = 0x800, scoped, tag = 'input window, operand 1, single buffered']
    #allocation6 [shape = 's32[1]{0}', space=sflag, size = 0x4, scoped, tag = 'scoped memory for tpu_custom_call.1']
    #allocation7 [shape = 'u8[2048]{0}', space=vmem, size = 0x800, scoped, tag = 'output window, operand 0, single buffered']
    #allocation8 [shape = 'u8[2048]{0}', space=vmem, size = 0x800, scoped, tag = 'output window, operand 1, single buffered']
    #allocation9 [shape = 's32[1]{0}', space=sflag, size = 0x4, scoped, tag = 'scoped memory for tpu_custom_call.1']
    %9 = vsyncpa [#allocation3], 0
    %10 = vsyncpa [#allocation6], 0
    %11 = vsyncpa [#allocation4], 0
    %12 = vsyncpa [#allocation9], 0
    // Predicated region
    $region2: #{tpu_custom_call.1} parent=1 // pred_check
      _
    $region3: #{tpu_custom_call.1} parent=1 // pred_check_branch
      %14 = sbr.rel (0) target = $region5
    $region4: #{tpu_custom_call.1} parent=1 // pred_region
      %s16 = ssub.s32 64, 64
      %17 = vsyncadd [#allocation3], %s16
      %s19 = sshll.u32 [#allocation2], 4
      %s20 = int_to_ptr.vmem [resolvable:$true] %s19
      %22 = dma.hbm_to_vmem [thread:$0]  %s0, 64, %s20, [#allocation3]
    $region5: #{tpu_custom_call.1} parent=1 // pred_fallthru
      _
    // Predicated region
    $region6: #{tpu_custom_call.1} parent=1 // pred_check
      _
    $region7: #{tpu_custom_call.1} parent=1 // pred_check_branch
      %24 = sbr.rel (0) target = $region9
    $region8: #{tpu_custom_call.1} parent=1 // pred_region
      %s26 = ssub.s32 64, 64
      %27 = vsyncadd [#allocation6], %s26
      %s29 = sshll.u32 [#allocation5], 4
      %s30 = int_to_ptr.vmem [resolvable:$true] %s29
      %32 = dma.hbm_to_vmem [thread:$0]  %s1, 64, %s30, [#allocation6]
    $region9: #{tpu_custom_call.1} parent=1 // pred_fallthru
      _
    // Predicated region
    $region10: #{tpu_custom_call.1} parent=1 // pred_check
      _
    $region11: #{tpu_custom_call.1} parent=1 // pred_check_branch
      %34 = sbr.rel (0) target = $region13
    $region12: #{tpu_custom_call.1} parent=1 // pred_region
      %35 = dma.done [#allocation3], 64
    $region13: #{tpu_custom_call.1} parent=1 // pred_fallthru
      _
    // Predicated region
    $region14: #{tpu_custom_call.1} parent=1 // pred_check
      _
    $region15: #{tpu_custom_call.1} parent=1 // pred_check_branch
      %37 = sbr.rel (0) target = $region17
    $region16: #{tpu_custom_call.1} parent=1 // pred_region
      %38 = dma.done [#allocation6], 64
    $region17: #{tpu_custom_call.1} parent=1 // pred_fallthru
      _
    %v39 = vld [vmem:[#allocation2] sm:$0xf]
    %40 = vst [vmem:[#allocation7] sm:$0xf] %v39
    %v41 = vld [vmem:[#allocation5] sm:$0xf]
    %42 = vst [vmem:[#allocation8] sm:$0xf] %v41
    // Predicated region
    $region18: #{tpu_custom_call.1} parent=1 // pred_check
      _
    $region19: #{tpu_custom_call.1} parent=1 // pred_check_branch
      %44 = sbr.rel (0) target = $region21
    $region20: #{tpu_custom_call.1} parent=1 // pred_region
      %s46 = ssub.s32 64, 64
      %47 = vsyncadd [#allocation4], %s46
      %s49 = sshll.u32 [#allocation7], 4
      %s50 = int_to_ptr.vmem [resolvable:$true] %s49
      %52 = dma.vmem_to_hbm [thread:$0]  %s50, 64, %s2, [#allocation4]
    $region21: #{tpu_custom_call.1} parent=1 // pred_fallthru
      _
    // Predicated region
    $region22: #{tpu_custom_call.1} parent=1 // pred_check
      _
    $region23: #{tpu_custom_call.1} parent=1 // pred_check_branch
      %54 = sbr.rel (0) target = $region25
    $region24: #{tpu_custom_call.1} parent=1 // pred_region
      %s56 = ssub.s32 64, 64
      %57 = vsyncadd [#allocation9], %s56
      %s59 = sshll.u32 [#allocation8], 4
      %s60 = int_to_ptr.vmem [resolvable:$true] %s59
      %62 = dma.vmem_to_hbm [thread:$0]  %s60, 64, %s3, [#allocation9]
    $region25: #{tpu_custom_call.1} parent=1 // pred_fallthru
      _
    // Predicated region
    $region26: #{tpu_custom_call.1} parent=1 // pred_check
      _
    $region27: #{tpu_custom_call.1} parent=1 // pred_check_branch
      %64 = sbr.rel (0) target = $region29
    $region28: #{tpu_custom_call.1} parent=1 // pred_region
      %65 = dma.done [#allocation4], 64
    $region29: #{tpu_custom_call.1} parent=1 // pred_fallthru
      _
    // Predicated region
    $region30: #{tpu_custom_call.1} parent=1 // pred_check
      _
    $region31: #{tpu_custom_call.1} parent=1 // pred_check_branch
      %67 = sbr.rel (0) target = $region33
    $region32: #{tpu_custom_call.1} parent=1 // pred_region
      %68 = dma.done [#allocation9], 64
    $region33: #{tpu_custom_call.1} parent=1 // pred_fallthru
      _
    %69 = vsyncpa [#allocation3], 1
    %70 = vsyncpa [#allocation6], 1
    %71 = vsyncpa [#allocation4], 1
    %72 = vsyncpa [#allocation9], 1

</llo_original>
